<compile_context>
chip_gen: v7x
topology: tpu7x:2x2x1
jax: 0.10.0
libtpu: 0.0.40
codegen_flags: <defaults>
</compile_context>

<pallas_src>
import functools

import jax
import jax.numpy as jnp
from jax.experimental import pallas as pl
from jax.experimental.pallas import tpu as pltpu


_VMEM_BUDGET = 12 * 1024 * 1024   # stays under every generation's default scoped limit


def _round_up(x, m):
    return ((x + m - 1) // m) * m


def _block_vmem_bytes(tb, s, d, h, n_last):
    """Rough per-step VMEM footprint for a batch block of TB rows."""
    bf16, f32 = 2, 4
    # Double-buffered streamed blocks (keys, query, and both outputs).
    stream = 2 * (tb * s * d * bf16          # keys block
                  + tb * n_last * h * bf16   # query block
                  + tb * d * f32             # context out block
                  + tb * s * f32)            # attention out block
    # Weight blocks (constant index_map => revisited, still double-buffered).
    weights = 2 * (2 * d * d * bf16 + 8 * d * f32)
    # f32 in-kernel temporaries: keys_proj, energy, weighted keys (keys-sized).
    temps = 3 * tb * s * d * f32
    return stream + weights + temps


def _choose_batch_block(b_pad, s, d, h, n_last):
    """Pick the per-step batch block TB.

    Constraints / preferences (from the perf review):
      * >= 2 grid steps whenever b_pad > 1 (software pipelining + both v7x TCs),
      * TB a multiple of 8 so the 2-D (TB, D)/(TB, S) output blocks stay
        sublane-aligned,
      * per-step footprint under the default scoped-VMEM limit,
      * >= 256 MXU rows per Ua matmul when compatible with the above (128 rows
        already saturate v5e's 4x128^2 MXU, so prefer MORE grid steps over
        ever-larger blocks).
    """
    if b_pad == 1:
        return 1
    candidates = [tb for tb in range(8, b_pad // 2 + 1, 8)
                  if b_pad % tb == 0
                  and _block_vmem_bytes(tb, s, d, h, n_last) <= _VMEM_BUDGET]
    if not candidates:
        return 8   # 16 | b_pad, so TB=8 always divides and gives >= 2 steps
    big_enough = [tb for tb in candidates if tb * s >= 256]
    return min(big_enough) if big_enough else max(candidates)


def _bahdanau_kernel(q_ref, k_ref, wa_ref, ua_ref, va_ref, ctx_ref, attn_ref,
                     *, bidirectional, s_real):
    # q_ref   : (TB, n_last, H) bf16 — only the query layers the forward reads
    # k_ref   : (TB, S, D)      bf16 — encoder keys (S possibly padded to 8k)
    # wa_ref  : (D, D)          bf16 — Wa.weight.T
    # ua_ref  : (D, D)          bf16 — Ua.weight.T
    # va_ref  : (1, D)          f32  — Va.weight row
    # ctx_ref : (TB, D)         f32  — context output (lane-dense 2-D slab)
    # attn_ref: (TB, S)         f32  — attention-weight output
    TB, S, D = k_ref.shape
    H = q_ref.shape[2]

    # ---- Wa(query_t): torch.cat([q[:,-2], q[:,-1]], dim=1) fused into a
    # row-split matmul: q_cat @ Wa^T == q[-2] @ Wa^T[:H] + q[-1] @ Wa^T[H:].
    if bidirectional:
        q_proj = (
            jnp.dot(q_ref[:, 0, :], wa_ref[pl.ds(0, H), :],
                    preferred_element_type=jnp.float32)
            + jnp.dot(q_ref[:, 1, :], wa_ref[pl.ds(H, H), :],
                      preferred_element_type=jnp.float32))           # (TB, D) f32
    else:
        q_proj = jnp.dot(q_ref[:, 0, :], wa_ref[...],
                         preferred_element_type=jnp.float32)         # (TB, D) f32

    # ---- Ua(keys): one (TB*S, D) @ (D, D) bf16 MXU matmul, f32 accumulation.
    k3 = k_ref[...]                                                   # (TB,S,D) bf16
    k_proj = jnp.dot(k3.reshape(TB * S, D), ua_ref[...],
                     preferred_element_type=jnp.float32)              # (TB*S, D) f32

    # ---- energy = tanh(Wa(q) + Ua(k)), q broadcast over the sequence axis.
    energy = jnp.tanh(q_proj[:, None, :] + k_proj.reshape(TB, S, D))  # (TB,S,D) f32

    # ---- Va(energy): N=1 MXU matmul replaced by VPU multiply + lane reduce.
    va = va_ref[...].reshape(1, 1, D)                                 # (1,1,D) f32
    scores = jnp.sum(energy * va, axis=-1)                            # (TB, S) f32

    # Mask sequence positions added by the wrapper's pad-to-multiple-of-8.
    if s_real < S:
        col = jax.lax.broadcasted_iota(jnp.int32, (TB, S), 1)
        scores = jnp.where(col < s_real, scores, -1e30)

    # ---- softmax over the sequence axis (lane axis of the (TB, S) tile).
    m = jnp.max(scores, axis=-1, keepdims=True)                       # (TB, 1)
    e = jnp.exp(scores - m)                                           # (TB, S)
    denom = jnp.sum(e, axis=-1, keepdims=True)                        # (TB, 1)
    inv = pl.reciprocal(denom, approx=True)                           # EUP slot
    inv = inv * (2.0 - denom * inv)        # one Newton step -> ~f32-exact
    w = e * inv                                                       # (TB, S)

    # ---- context = attention_weights @ keys (f32 weighted sum over S).
    ctx = jnp.sum(w[:, :, None] * k3.astype(jnp.float32), axis=1)     # (TB, D)

    ctx_ref[...] = ctx.astype(ctx_ref.dtype)
    attn_ref[...] = w.astype(attn_ref.dtype)


def bahdanau_attention(query, keys, wa_t, ua_t, va_row, *, bidirectional=True):
    """query: (B, L, H); keys: (B, S, D) with D = H * (1 + bidirectional).

    wa_t / ua_t are the transposed Linear weights (y = x @ W^T); va_row is
    Va.weight with shape (1, D).  Returns (context (B,1,D), attn (B,1,S))
    exactly like the PyTorch module (MXU operands run in bfloat16).
    """
    B, L, H = query.shape
    _, S, D = keys.shape
    n_last = 2 if bidirectional else 1
    assert D == H * n_last, "keys feature dim must be hidden_size*(1+bidirectional)"
    assert wa_t.shape == (D, D) and ua_t.shape == (D, D) and va_row.shape == (1, D)

    # Only DMA the query layers the forward actually reads; bf16 MXU operands.
    q_in = query[:, L - n_last:, :].astype(jnp.bfloat16)          # (B, n_last, H)

    # Pad S to a sublane multiple so in-kernel reshapes are layout-preserving
    # collapses; padded columns are masked to -inf before the softmax.
    s_pad = _round_up(S, 8)
    keys_in = keys if s_pad == S else jnp.pad(keys, ((0, 0), (0, s_pad - S), (0, 0)))
    keys_in = keys_in.astype(jnp.bfloat16)

    # Pad the batch so it splits into >= 2 sublane-aligned grid steps:
    # enables DMA/compute pipelining everywhere and both TensorCores on v7x.
    b_pad = B if B == 1 else _round_up(B, 16)
    if b_pad != B:
        q_in = jnp.pad(q_in, ((0, b_pad - B), (0, 0), (0, 0)))
        keys_in = jnp.pad(keys_in, ((0, b_pad - B), (0, 0), (0, 0)))

    wa_in = wa_t.astype(jnp.bfloat16)
    ua_in = ua_t.astype(jnp.bfloat16)
    va_in = va_row.astype(jnp.float32)

    TB = _choose_batch_block(b_pad, s_pad, D, H, n_last)
    grid = (b_pad // TB,)

    kernel = functools.partial(_bahdanau_kernel,
                               bidirectional=bidirectional, s_real=S)

    grid_spec = pltpu.PrefetchScalarGridSpec(
        num_scalar_prefetch=0,
        grid=grid,
        in_specs=[
            pl.BlockSpec((TB, n_last, H), lambda b: (b, 0, 0)),   # query (last layers)
            pl.BlockSpec((TB, s_pad, D), lambda b: (b, 0, 0)),    # keys
            # Constant index_map -> weight tiles are revisited (not re-DMA'd)
            # across grid steps.  For large D, drop their double-buffering with
            # pipeline_mode=pl.Buffered(1) or stage once into VMEM scratch.
            pl.BlockSpec((D, D), lambda b: (0, 0)),               # Wa^T
            pl.BlockSpec((D, D), lambda b: (0, 0)),               # Ua^T
            pl.BlockSpec((1, D), lambda b: (0, 0)),               # Va row
        ],
        out_specs=[
            pl.BlockSpec((TB, D), lambda b: (b, 0)),              # context (2-D, lane-dense)
            pl.BlockSpec((TB, s_pad), lambda b: (b, 0)),          # attention weights
        ],
    )

    est = _block_vmem_bytes(TB, s_pad, D, H, n_last)
    vmem_limit = None if est <= _VMEM_BUDGET else min(est + (4 << 20), 56 << 20)

    ctx2d, attn2d = pl.pallas_call(
        kernel,
        out_shape=(
            jax.ShapeDtypeStruct((b_pad, D), jnp.float32),
            jax.ShapeDtypeStruct((b_pad, s_pad), jnp.float32),
        ),
        grid_spec=grid_spec,
        compiler_params=pltpu.CompilerParams(
            dimension_semantics=("parallel",),
            vmem_limit_bytes=vmem_limit),
    )(q_in, keys_in, wa_in, ua_in, va_in)

    # Drop batch/sequence padding and restore PyTorch shapes (B,1,D)/(B,1,S).
    return ctx2d[:B, None, :], attn2d[:B, None, :S]


def _reference(query, keys, wa_t, ua_t, va_row, *, bidirectional=True):
    """Pure-JAX reference mirroring the PyTorch forward exactly."""
    if bidirectional:
        query_t = jnp.concatenate([query[:, -2, :], query[:, -1, :]], axis=1)[:, None, :]
    else:
        query_t = query[:, -1, :][:, None, :]
    q_proj = query_t @ wa_t
    k_proj = keys @ ua_t
    energy = jnp.tanh(q_proj + k_proj)
    scores = (energy @ va_row.T)[..., 0]                # (B, S)
    attn = jax.nn.softmax(scores, axis=1)[:, None, :]   # (B, 1, S)
    ctx = attn @ keys                                   # (B, 1, D)
    return ctx, attn


if __name__ == "__main__":
    # Module hyper-params (synthetic, deterministic)
    NUM_LAYERS = 2
    HIDDEN = 64
    BIDIRECTIONAL = True
    D = HIDDEN * (1 + int(BIDIRECTIONAL))        # 128
    B = 2
    S = 8
    L = NUM_LAYERS * (1 + int(BIDIRECTIONAL))    # query "layer" slots

    key = jax.random.PRNGKey(0)
    k1, k2, k3, k4, k5 = jax.random.split(key, 5)

    # Parameters: PyTorch nn.Linear(in=D, out=*) weight shapes; pass transposed.
    bound = 1.0 / jnp.sqrt(D)
    wa_weight = jax.random.uniform(k1, (D, D), jnp.float32, -bound, bound)  # Wa.weight
    ua_weight = jax.random.uniform(k2, (D, D), jnp.float32, -bound, bound)  # Ua.weight
    va_weight = jax.random.uniform(k3, (1, D), jnp.float32, -bound, bound)  # Va.weight
    wa_t = wa_weight.T
    ua_t = ua_weight.T
    va_row = va_weight                                                      # (1, D)

    # Inputs
    query = jax.random.normal(k4, (B, L, HIDDEN), jnp.float32)
    keys = jax.random.normal(k5, (B, S, D), jnp.float32)

    ctx, attn = bahdanau_attention(query, keys, wa_t, ua_t, va_row,
                                   bidirectional=BIDIRECTIONAL)
    jax.block_until_ready((ctx, attn))

    assert ctx.shape == (B, 1, D) and attn.shape == (B, 1, S)

    # Tight check: reference evaluated on the same bf16-rounded MXU operands
    # (the kernel feeds the MXU bf16 and accumulates in f32).
    rnd = lambda x: x.astype(jnp.bfloat16).astype(jnp.float32)
    ctx_bf, attn_bf = _reference(rnd(query), rnd(keys), rnd(wa_t), rnd(ua_t),
                                 va_row, bidirectional=BIDIRECTIONAL)
    assert jnp.allclose(ctx, ctx_bf, atol=5e-3, rtol=5e-3)
    assert jnp.allclose(attn, attn_bf, atol=5e-3, rtol=5e-3)

    # Loose check against the full-f32 module semantics (bf16 MXU operands).
    ctx_f32, attn_f32 = _reference(query, keys, wa_t, ua_t, va_row,
                                   bidirectional=BIDIRECTIONAL)
    assert jnp.allclose(ctx, ctx_f32, atol=5e-2, rtol=5e-2)
    assert jnp.allclose(attn, attn_f32, atol=5e-2, rtol=5e-2)

    print("KERNEL_OK")
</pallas_src>

<mosaic_0001>
module attributes {stable_mosaic.version = 11 : i64} {
  func.func @_bahdanau_kernel(%arg0: i32, %arg1: memref<8x2x64xbf16, #tpu.memory_space<vmem>>, %arg2: memref<8x8x128xbf16, #tpu.memory_space<vmem>>, %arg3: memref<128x128xbf16, #tpu.memory_space<vmem>>, %arg4: memref<128x128xbf16, #tpu.memory_space<vmem>>, %arg5: memref<1x128xf32, #tpu.memory_space<vmem>>, %arg6: memref<8x128xf32, #tpu.memory_space<vmem>>, %arg7: memref<8x8xf32, #tpu.memory_space<vmem>>) attributes {dimension_semantics = [#tpu.dimension_semantics<parallel>], iteration_bounds = array<i64: 2>, scalar_prefetch = 0 : i64, scratch_operands = 0 : i64, tpu.core_type = #tpu.core_type<tc>, window_params = [{transform_indices = @transform_0, window_bounds = array<i64: 8, 2, 64>}, {transform_indices = @transform_1, window_bounds = array<i64: 8, 8, 128>}, {pipeline_mode = #tpu.pipeline_mode<synchronous>, transform_indices = @transform_2, window_bounds = array<i64: 128, 128>}, {pipeline_mode = #tpu.pipeline_mode<synchronous>, transform_indices = @transform_3, window_bounds = array<i64: 128, 128>}, {pipeline_mode = #tpu.pipeline_mode<synchronous>, transform_indices = @transform_4, window_bounds = array<i64: 1, 128>}, {transform_indices = @transform_5, window_bounds = array<i64: 8, 128>}, {transform_indices = @transform_6, window_bounds = array<i64: 8, 8>}]} {
    %c0 = arith.constant 0 : index
    %c0_0 = arith.constant 0 : index
    %c0_1 = arith.constant 0 : index
    %0 = vector.load %arg1[%c0, %c0_0, %c0_1] : memref<8x2x64xbf16, #tpu.memory_space<vmem>>, vector<8x1x64xbf16>
    %1 = vector.shape_cast %0 : vector<8x1x64xbf16> to vector<8x64xbf16>
    %c0_2 = arith.constant 0 : index
    %c0_3 = arith.constant 0 : index
    %2 = vector.load %arg3[%c0_2, %c0_3] : memref<128x128xbf16, #tpu.memory_space<vmem>>, vector<64x128xbf16>
    %cst = arith.constant dense<0.000000e+00> : vector<8x128xf32>
    %3 = tpu.matmul %1, %2, %cst {dimension_numbers = #tpu.dot_dimension_numbers<[1], [0], [0], [1], [0, 0, 1, 1], [], []>} : vector<8x64xbf16>, vector<64x128xbf16>, vector<8x128xf32> -> vector<8x128xf32>
    %c0_4 = arith.constant 0 : index
    %c1 = arith.constant 1 : index
    %c0_5 = arith.constant 0 : index
    %4 = vector.load %arg1[%c0_4, %c1, %c0_5] : memref<8x2x64xbf16, #tpu.memory_space<vmem>>, vector<8x1x64xbf16>
    %5 = vector.shape_cast %4 : vector<8x1x64xbf16> to vector<8x64xbf16>
    %c64 = arith.constant 64 : index
    %c0_6 = arith.constant 0 : index
    %6 = vector.load %arg3[%c64, %c0_6] : memref<128x128xbf16, #tpu.memory_space<vmem>>, vector<64x128xbf16>
    %cst_7 = arith.constant dense<0.000000e+00> : vector<8x128xf32>
    %7 = tpu.matmul %5, %6, %cst_7 {dimension_numbers = #tpu.dot_dimension_numbers<[1], [0], [0], [1], [0, 0, 1, 1], [], []>} : vector<8x64xbf16>, vector<64x128xbf16>, vector<8x128xf32> -> vector<8x128xf32>
    %8 = arith.addf %3, %7 : vector<8x128xf32>
    %c0_8 = arith.constant 0 : index
    %c0_9 = arith.constant 0 : index
    %c0_10 = arith.constant 0 : index
    %9 = vector.load %arg2[%c0_8, %c0_9, %c0_10] : memref<8x8x128xbf16, #tpu.memory_space<vmem>>, vector<8x8x128xbf16>
    %10 = vector.shape_cast %9 : vector<8x8x128xbf16> to vector<64x128xbf16>
    %c0_11 = arith.constant 0 : index
    %c0_12 = arith.constant 0 : index
    %11 = vector.load %arg4[%c0_11, %c0_12] : memref<128x128xbf16, #tpu.memory_space<vmem>>, vector<128x128xbf16>
    %cst_13 = arith.constant dense<0.000000e+00> : vector<64x128xf32>
    %12 = tpu.matmul %10, %11, %cst_13 {dimension_numbers = #tpu.dot_dimension_numbers<[1], [0], [0], [1], [0, 0, 1, 1], [], []>} : vector<64x128xbf16>, vector<128x128xbf16>, vector<64x128xf32> -> vector<64x128xf32>
    %13 = vector.shape_cast %8 : vector<8x128xf32> to vector<8x1x128xf32>
    %14 = vector.shape_cast %12 : vector<64x128xf32> to vector<8x8x128xf32>
    %15 = vector.broadcast %13 : vector<8x1x128xf32> to vector<8x8x128xf32>
    %16 = arith.addf %15, %14 : vector<8x8x128xf32>
    %17 = math.tanh %16 : vector<8x8x128xf32>
    %c0_14 = arith.constant 0 : index
    %c0_15 = arith.constant 0 : index
    %18 = vector.load %arg5[%c0_14, %c0_15] : memref<1x128xf32, #tpu.memory_space<vmem>>, vector<1x128xf32>
    %19 = vector.shape_cast %18 : vector<1x128xf32> to vector<1x1x128xf32>
    %20 = vector.broadcast %19 : vector<1x1x128xf32> to vector<8x8x128xf32>
    %21 = arith.mulf %17, %20 : vector<8x8x128xf32>
    %cst_16 = arith.constant dense<0.000000e+00> : vector<8x8xf32>
    %22 = vector.multi_reduction <add>, %21, %cst_16 [2] : vector<8x8x128xf32> to vector<8x8xf32>
    %cst_17 = arith.constant dense<0xFF800000> : vector<8xf32>
    %23 = vector.multi_reduction <maximumf>, %22, %cst_17 [1] : vector<8x8xf32> to vector<8xf32>
    %24 = vector.shape_cast %23 : vector<8xf32> to vector<8x1xf32>
    %25 = vector.broadcast %24 : vector<8x1xf32> to vector<8x8xf32>
    %26 = arith.subf %22, %25 : vector<8x8xf32>
    %27 = math.exp %26 : vector<8x8xf32>
    %cst_18 = arith.constant dense<0.000000e+00> : vector<8xf32>
    %28 = vector.multi_reduction <add>, %27, %cst_18 [1] : vector<8x8xf32> to vector<8xf32>
    %29 = vector.shape_cast %28 : vector<8xf32> to vector<8x1xf32>
    %30 = tpu.reciprocal %29 {approx = true} : vector<8x1xf32> -> vector<8x1xf32>
    %31 = arith.mulf %29, %30 : vector<8x1xf32>
    %cst_19 = arith.constant 2.000000e+00 : f32
    %32 = vector.broadcast %cst_19 : f32 to vector<8x1xf32>
    %33 = arith.subf %32, %31 : vector<8x1xf32>
    %34 = arith.mulf %30, %33 : vector<8x1xf32>
    %35 = vector.broadcast %34 : vector<8x1xf32> to vector<8x8xf32>
    %36 = arith.mulf %27, %35 : vector<8x8xf32>
    %37 = vector.shape_cast %36 : vector<8x8xf32> to vector<8x8x1xf32>
    %38 = arith.extf %9 : vector<8x8x128xbf16> to vector<8x8x128xf32>
    %39 = vector.broadcast %37 : vector<8x8x1xf32> to vector<8x8x128xf32>
    %40 = arith.mulf %39, %38 : vector<8x8x128xf32>
    %cst_20 = arith.constant dense<0.000000e+00> : vector<8x128xf32>
    %41 = vector.multi_reduction <add>, %40, %cst_20 [1] : vector<8x8x128xf32> to vector<8x128xf32>
    %c0_21 = arith.constant 0 : index
    %c0_22 = arith.constant 0 : index
    %42 = vector.load %arg6[%c0_21, %c0_22] : memref<8x128xf32, #tpu.memory_space<vmem>>, vector<8x128xf32>
    tpu.vector_store %arg6[%c0_21, %c0_22], %41 {strides = array<i32>} : memref<8x128xf32, #tpu.memory_space<vmem>>, vector<8x128xf32>,
    %c0_23 = arith.constant 0 : index
    %c0_24 = arith.constant 0 : index
    %43 = vector.load %arg7[%c0_23, %c0_24] : memref<8x8xf32, #tpu.memory_space<vmem>>, vector<8x8xf32>
    tpu.vector_store %arg7[%c0_23, %c0_24], %36 {strides = array<i32>} : memref<8x8xf32, #tpu.memory_space<vmem>>, vector<8x8xf32>,
    return
  }
  func.func @transform_0(%arg0: i32) -> (i32, i32, i32) {
    %c0_i32 = arith.constant 0 : i32
    %c0_i32_0 = arith.constant 0 : i32
    %c0_i32_1 = arith.constant 0 : i32
    return %arg0, %c0_i32, %c0_i32_0 : i32, i32, i32
  }
  func.func @transform_1(%arg0: i32) -> (i32, i32, i32) {
    %c0_i32 = arith.constant 0 : i32
    %c0_i32_0 = arith.constant 0 : i32
    %c0_i32_1 = arith.constant 0 : i32
    return %arg0, %c0_i32, %c0_i32_0 : i32, i32, i32
  }
  func.func @transform_2(%arg0: i32) -> (i32, i32) {
    %c0_i32 = arith.constant 0 : i32
    %c0_i32_0 = arith.constant 0 : i32
    %c0_i32_1 = arith.constant 0 : i32
    return %c0_i32, %c0_i32_0 : i32, i32
  }
  func.func @transform_3(%arg0: i32) -> (i32, i32) {
    %c0_i32 = arith.constant 0 : i32
    %c0_i32_0 = arith.constant 0 : i32
    %c0_i32_1 = arith.constant 0 : i32
    return %c0_i32, %c0_i32_0 : i32, i32
  }
  func.func @transform_4(%arg0: i32) -> (i32, i32) {
    %c0_i32 = arith.constant 0 : i32
    %c0_i32_0 = arith.constant 0 : i32
    %c0_i32_1 = arith.constant 0 : i32
    return %c0_i32, %c0_i32_0 : i32, i32
  }
  func.func @transform_5(%arg0: i32) -> (i32, i32) {
    %c0_i32 = arith.constant 0 : i32
    %c0_i32_0 = arith.constant 0 : i32
    return %arg0, %c0_i32 : i32, i32
  }
  func.func @transform_6(%arg0: i32) -> (i32, i32) {
    %c0_i32 = arith.constant 0 : i32
    %c0_i32_0 = arith.constant 0 : i32
    return %arg0, %c0_i32 : i32, i32
  }
}

</mosaic_0001>

<llo_original>
// kernel: tpu_custom_call.1
$region0: #{tpu_custom_call.1}
  #allocation0 [shape = 'u32[]', space=smem, size = 0x4, offset = 0x4, fixed_abs, tag = 'smem constant byte address 0x4 - core index']
  #allocation1 [shape = 'u32[144,128]{1,0:T(1,128)}', space=vmem, size = 0x12000, scoped, tag = 'internal scratch']
  %s0 = inlined_call_operand.hbm [shape: bf16[16,2,64], index: 0, kind: input, shape index: {}]
  %s1 = inlined_call_operand.hbm [shape: bf16[16,8,128], index: 1, kind: input, shape index: {}]
  %s2 = inlined_call_operand.hbm [shape: bf16[128,128], index: 2, kind: input, shape index: {}]
  %s3 = inlined_call_operand.hbm [shape: bf16[128,128], index: 3, kind: input, shape index: {}]
  %s4 = inlined_call_operand.vmem [shape: f32[1,128], index: 4, kind: input, shape index: {}]
  %s5 = inlined_call_operand.hbm [shape: f32[16,128], index: 5, kind: output, shape index: {0}]
  %s6 = inlined_call_operand.vmem [shape: f32[16,8], index: 6, kind: output, shape index: {1}]
  %7 = xla_tuple %s5, %s6
  %s8 = sld [smem:[#allocation0]]
  $region77: #{tpu_custom_call.1} parent=0
    _
  %s10 = ssub.s32 1, %s8
  %s11 = scalar_select 0, %s10, %s8
  $region1: #{tpu_custom_call.1} parent=0
    #allocation2 [shape = 'u8[8192]{0}', space=vmem, size = 0x2000, scoped, tag = 'input window, operand 0']
    #allocation3 [shape = 's32[2]{0}', space=sflag, size = 0x8, scoped, tag = 'scoped memory for tpu_custom_call.1']
    #allocation4 [shape = 's32[2]{0}', space=sflag, size = 0x8, scoped, tag = 'scoped memory for tpu_custom_call.1']
    #allocation5 [shape = 'u8[32768]{0}', space=vmem, size = 0x8000, scoped, tag = 'input window, operand 1']
    #allocation6 [shape = 's32[2]{0}', space=sflag, size = 0x8, scoped, tag = 'scoped memory for tpu_custom_call.1']
    #allocation7 [shape = 'u8[32768]{0}', space=vmem, size = 0x8000, scoped, tag = 'input window, operand 2, single buffered']
    #allocation8 [shape = 'u8[32768]{0}', space=vmem, size = 0x8000, scoped, tag = 'input window, operand 3, single buffered']
    #allocation9 [shape = 's32[1]{0}', space=sflag, size = 0x4, scoped, tag = 'scoped memory for tpu_custom_call.1']
    #allocation10 [shape = 'u8[8192]{0}', space=vmem, size = 0x2000, scoped, tag = 'output window, operand 0']
    %12 = vsyncpa [#allocation3], 0
    %s13 = scalar_lea.sflag [#allocation3], 1
    %14 = vsyncpa %s13, 0
    %15 = vsyncpa [#allocation6], 0
    %s16 = scalar_lea.sflag [#allocation6], 1
    %17 = vsyncpa %s16, 0
    %18 = vsyncpa [#allocation9], 0
    %19 = vsyncpa [#allocation4], 0
    %s20 = scalar_lea.sflag [#allocation4], 1
    %21 = vsyncpa %s20, 0
    loop: start=0, step=1, limit=4
    $region2: #{tpu_custom_call.1} parent=1 // loop_pre_header
      _
    $region3: #{tpu_custom_call.1} parent=1 // loop_header
      %s23 = sphi 0, %s27
      %p24 = scmp.ge.s32.totalorder %s23, 4
      %s33 = sphi 0, %s35
      %s36 = sphi 0, %s33
      %s37 = sphi 0, %s36
      %s53 = sphi 0, %s37
      %s59 = sphi 0, %s61
      %s62 = sphi 0, %s59
      %s63 = sphi 0, %s62
      %s79 = sphi 0, %s63
      %s83 = sphi 0, %s83
      %s85 = sphi 0, %s83
      %s86 = sphi 0, %s85
      %s100 = sphi 0, %s86
      %s104 = sphi 0, %s104
      %s106 = sphi 0, %s104
      %s107 = sphi 0, %s106
      %s121 = sphi 0, %s107
      %s125 = sphi 0, %s125
      %s127 = sphi 0, %s125
      %s128 = sphi 0, %s127
      %s142 = sphi 0, %s128
      %s148 = sphi 0, %s150
      %s151 = sphi 0, %s148
      %s152 = sphi 0, %s151
      %s168 = sphi 0, %s152
      %s174 = sphi 0, %s176
      %s177 = sphi 0, %s174
      %s178 = sphi 0, %s177
      %s194 = sphi 0, %s178
    $region4: #{tpu_custom_call.1} parent=1 // loop_header_branch
      %26 = sbr.rel (%p24) target = $region8
    $region5: #{tpu_custom_call.1} parent=1 // loop_body
      %s28 = ssub.s32 %s23, 1
      %s29 = ssub.s32 %s23, 2
      %s30 = sadd.s32 %s23, 1
      %s31 = ssub.s32 %s23, %s30
      %p32 = scmp.eq.s32.totalorder %s31, 0
      %s34 = sadd.s32 %s33, 1
      %s35 = scalar_select %p32, %s33, %s34
      %p38 = pneg %p32
      %p39 = scmp.eq.s32.totalorder %s23, 1
      %p40 = por %p38, %p39
      %p41 = scmp.ne.s32.totalorder %s33, %s36
      %p42 = scmp.eq.s32.totalorder %s23, 0
      %p43 = por %p41, %p42
      %p44 = scmp.ne.s32.totalorder %s33, %s36
      %p45 = scmp.eq.s32.totalorder %s28, 1
      %p46 = por %p44, %p45
      %p47 = scmp.ne.s32.totalorder %s36, %s37
      %p48 = scmp.eq.s32.totalorder %s28, 0
      %p49 = por %p47, %p48
      %p50 = scmp.ne.s32.totalorder %s36, %s37
      %p51 = scmp.eq.s32.totalorder %s29, 1
      %p52 = por %p50, %p51
      %p54 = scmp.ne.s32.totalorder %s37, %s53
      %p55 = scmp.eq.s32.totalorder %s29, 0
      %p56 = por %p54, %p55
      %s57 = ssub.s32 %s23, %s30
      %p58 = scmp.eq.s32.totalorder %s57, 0
      %s60 = sadd.s32 %s59, 1
      %s61 = scalar_select %p58, %s59, %s60
      %p64 = pneg %p58
      %p65 = scmp.eq.s32.totalorder %s23, 1
      %p66 = por %p64, %p65
      %p67 = scmp.ne.s32.totalorder %s59, %s62
      %p68 = scmp.eq.s32.totalorder %s23, 0
      %p69 = por %p67, %p68
      %p70 = scmp.ne.s32.totalorder %s59, %s62
      %p71 = scmp.eq.s32.totalorder %s28, 1
      %p72 = por %p70, %p71
      %p73 = scmp.ne.s32.totalorder %s62, %s63
      %p74 = scmp.eq.s32.totalorder %s28, 0
      %p75 = por %p73, %p74
      %p76 = scmp.ne.s32.totalorder %s62, %s63
      %p77 = scmp.eq.s32.totalorder %s29, 1
      %p78 = por %p76, %p77
      %p80 = scmp.ne.s32.totalorder %s63, %s79
      %p81 = scmp.eq.s32.totalorder %s29, 0
      %p82 = por %p80, %p81
      %s84 = sadd.s32 %s83, 1
      %p87 = scmp.eq.s32.totalorder %s23, 1
      %p88 = scmp.ne.s32.totalorder %s83, %s85
      %p89 = scmp.eq.s32.totalorder %s23, 0
      %p90 = por %p88, %p89
      %p91 = scmp.ne.s32.totalorder %s83, %s85
      %p92 = scmp.eq.s32.totalorder %s28, 1
      %p93 = por %p91, %p92
      %p94 = scmp.ne.s32.totalorder %s85, %s86
      %p95 = scmp.eq.s32.totalorder %s28, 0
      %p96 = por %p94, %p95
      %p97 = scmp.ne.s32.totalorder %s85, %s86
      %p98 = scmp.eq.s32.totalorder %s29, 1
      %p99 = por %p97, %p98
      %p101 = scmp.ne.s32.totalorder %s86, %s100
      %p102 = scmp.eq.s32.totalorder %s29, 0
      %p103 = por %p101, %p102
      %s105 = sadd.s32 %s104, 1
      %p108 = scmp.eq.s32.totalorder %s23, 1
      %p109 = scmp.ne.s32.totalorder %s104, %s106
      %p110 = scmp.eq.s32.totalorder %s23, 0
      %p111 = por %p109, %p110
      %p112 = scmp.ne.s32.totalorder %s104, %s106
      %p113 = scmp.eq.s32.totalorder %s28, 1
      %p114 = por %p112, %p113
      %p115 = scmp.ne.s32.totalorder %s106, %s107
      %p116 = scmp.eq.s32.totalorder %s28, 0
      %p117 = por %p115, %p116
      %p118 = scmp.ne.s32.totalorder %s106, %s107
      %p119 = scmp.eq.s32.totalorder %s29, 1
      %p120 = por %p118, %p119
      %p122 = scmp.ne.s32.totalorder %s107, %s121
      %p123 = scmp.eq.s32.totalorder %s29, 0
      %p124 = por %p122, %p123
      %s126 = sadd.s32 %s125, 1
      %p129 = scmp.eq.s32.totalorder %s23, 1
      %p130 = scmp.ne.s32.totalorder %s125, %s127
      %p131 = scmp.eq.s32.totalorder %s23, 0
      %p132 = por %p130, %p131
      %p133 = scmp.ne.s32.totalorder %s125, %s127
      %p134 = scmp.eq.s32.totalorder %s28, 1
      %p135 = por %p133, %p134
      %p136 = scmp.ne.s32.totalorder %s127, %s128
      %p137 = scmp.eq.s32.totalorder %s28, 0
      %p138 = por %p136, %p137
      %p139 = scmp.ne.s32.totalorder %s127, %s128
      %p140 = scmp.eq.s32.totalorder %s29, 1
      %p141 = por %p139, %p140
      %p143 = scmp.ne.s32.totalorder %s128, %s142
      %p144 = scmp.eq.s32.totalorder %s29, 0
      %p145 = por %p143, %p144
      %s146 = ssub.s32 %s23, %s30
      %p147 = scmp.eq.s32.totalorder %s146, 0
      %s149 = sadd.s32 %s148, 1
      %s150 = scalar_select %p147, %s148, %s149
      %p153 = pneg %p147
      %p154 = scmp.eq.s32.totalorder %s23, 1
      %p155 = por %p153, %p154
      %p156 = scmp.ne.s32.totalorder %s148, %s151
      %p157 = scmp.eq.s32.totalorder %s23, 0
      %p158 = por %p156, %p157
      %p159 = scmp.ne.s32.totalorder %s148, %s151
      %p160 = scmp.eq.s32.totalorder %s28, 1
      %p161 = por %p159, %p160
      %p162 = scmp.ne.s32.totalorder %s151, %s152
      %p163 = scmp.eq.s32.totalorder %s28, 0
      %p164 = por %p162, %p163
      %p165 = scmp.ne.s32.totalorder %s151, %s152
      %p166 = scmp.eq.s32.totalorder %s29, 1
      %p167 = por %p165, %p166
      %p169 = scmp.ne.s32.totalorder %s152, %s168
      %p170 = scmp.eq.s32.totalorder %s29, 0
      %p171 = por %p169, %p170
      %s172 = ssub.s32 %s23, %s30
      %p173 = scmp.eq.s32.totalorder %s172, 0
      %s175 = sadd.s32 %s174, 1
      %s176 = scalar_select %p173, %s174, %s175
      %p179 = pneg %p173
      %p180 = scmp.eq.s32.totalorder %s23, 1
      %p181 = por %p179, %p180
      %p182 = scmp.ne.s32.totalorder %s174, %s177
      %p183 = scmp.eq.s32.totalorder %s23, 0
      %p184 = por %p182, %p183
      %p185 = scmp.ne.s32.totalorder %s174, %s177
      %p186 = scmp.eq.s32.totalorder %s28, 1
      %p187 = por %p185, %p186
      %p188 = scmp.ne.s32.totalorder %s177, %s178
      %p189 = scmp.eq.s32.totalorder %s28, 0
      %p190 = por %p188, %p189
      %p191 = scmp.ne.s32.totalorder %s177, %s178
      %p192 = scmp.eq.s32.totalorder %s29, 1
      %p193 = por %p191, %p192
      %p195 = scmp.ne.s32.totalorder %s178, %s194
      %p196 = scmp.eq.s32.totalorder %s29, 0
      %p197 = por %p195, %p196
      %p198 = scmp.le.s32.totalorder 1, %s23
      %p199 = scmp.lt.s32.totalorder %s23, 3
      %p200 = pnand %p198, %p199
      %p201 = pneg %p200
      // Predicated region
      $region9: #{tpu_custom_call.1} parent=5 // pred_check
        _
      $region10: #{tpu_custom_call.1} parent=5 // pred_check_branch
        %203 = sbr.rel (%p200) target = $region12
      $region11: #{tpu_custom_call.1} parent=5 // pred_region
        %s204 = ssub.s32 %s23, 1
        // Predicated region
        $region13: #{tpu_custom_call.1} parent=11 // pred_check
          %p205 = pneg %p96
        $region14: #{tpu_custom_call.1} parent=11 // pred_check_branch
          %207 = sbr.rel (%p205) target = $region16
        $region15: #{tpu_custom_call.1} parent=11 // pred_region
          %s209 = ssub.s32 1024, 1024
          %210 = vsyncadd [#allocation6], %s209
          %s211 = sshll.u32 [#allocation7], 4
          %s212 = int_to_ptr.vmem [resolvable:$true] %s211
          %217 = dma.hbm_to_vmem [thread:$0]  %s2, 1024, %s212, [#allocation6], 64, 64, 4
        $region16: #{tpu_custom_call.1} parent=11 // pred_fallthru
          _
        // Predicated region
        $region17: #{tpu_custom_call.1} parent=11 // pred_check
          %p218 = pneg %p117
        $region18: #{tpu_custom_call.1} parent=11 // pred_check_branch
          %220 = sbr.rel (%p218) target = $region20
        $region19: #{tpu_custom_call.1} parent=11 // pred_region
          %s222 = ssub.s32 1024, 1024
          %223 = vsyncadd [#allocation9], %s222
          %s224 = sshll.u32 [#allocation8], 4
          %s225 = int_to_ptr.vmem [resolvable:$true] %s224
          %230 = dma.hbm_to_vmem [thread:$0]  %s3, 1024, %s225, [#allocation9], 64, 64, 4
        $region20: #{tpu_custom_call.1} parent=11 // pred_fallthru
          _
        // Predicated region
        $region21: #{tpu_custom_call.1} parent=11 // pred_check
          %p231 = pneg %p138
        $region22: #{tpu_custom_call.1} parent=11 // pred_check_branch
          %233 = sbr.rel (%p231) target = $region24
        $region23: #{tpu_custom_call.1} parent=11 // pred_region
          _
        $region24: #{tpu_custom_call.1} parent=11 // pred_fallthru
          _
      $region12: #{tpu_custom_call.1} parent=5 // pred_fallthru
        _
      %p234 = scmp.lt.s32.totalorder %s23, 2
      // Predicated region
      $region25: #{tpu_custom_call.1} parent=5 // pred_check
        %p235 = pneg %p234
      $region26: #{tpu_custom_call.1} parent=5 // pred_check_branch
        %237 = sbr.rel (%p235) target = $region28
      $region27: #{tpu_custom_call.1} parent=5 // pred_region
        // Predicated region
        $region29: #{tpu_custom_call.1} parent=27 // pred_check
          %p238 = pneg %p43
        $region30: #{tpu_custom_call.1} parent=27 // pred_check_branch
          %240 = sbr.rel (%p238) target = $region32
        $region31: #{tpu_custom_call.1} parent=27 // pred_region
          %s241 = sand.u32 %s33, 1
          %s242 = scalar_lea.sflag [#allocation3], %s241
          %s243 = sand.u32 %s33, 1
          %s244 = smul.addr %s243, 8
          %s245 = scalar_lea.vmem [#allocation2], %s244
          %s246 = smul.u32 8, %s23
          %s248 = ssub.s32 128, 128
          %249 = vsyncadd %s242, %s248
          %s250 = smul.addr %s246, 16
          %s251 = scalar_lea.hbm %s0, %s250
          %s252 = sshll.u32 %s245, 4
          %s253 = int_to_ptr.vmem [resolvable:$true] %s252
          %258 = dma.hbm_to_vmem [thread:$0]  %s251, 128, %s253, %s242, 16, 16, 1
        $region32: #{tpu_custom_call.1} parent=27 // pred_fallthru
          _
        // Predicated region
        $region33: #{tpu_custom_call.1} parent=27 // pred_check
          %p259 = pneg %p69
        $region34: #{tpu_custom_call.1} parent=27 // pred_check_branch
          %261 = sbr.rel (%p259) target = $region36
        $region35: #{tpu_custom_call.1} parent=27 // pred_region
          %s262 = sand.u32 %s23, 1
          %s263 = scalar_lea.sflag [#allocation6], %s262
          %s264 = sand.u32 %s59, 1
          %s265 = smul.addr %s264, 32
          %s266 = scalar_lea.vmem [#allocation5], %s265
          %s267 = smul.u32 8, %s23
          %s269 = ssub.s32 512, 512
          %270 = vsyncadd %s263, %s269
          %s271 = smul.addr %s267, 64
          %s272 = scalar_lea.hbm %s1, %s271
          %s273 = sshll.u32 %s266, 4
          %s274 = int_to_ptr.vmem [resolvable:$true] %s273
          %279 = dma.hbm_to_vmem [thread:$0]  %s272, 512, %s274, %s263, 64, 64, 4
        $region36: #{tpu_custom_call.1} parent=27 // pred_fallthru
          _
      $region28: #{tpu_custom_call.1} parent=5 // pred_fallthru
        _
      %p280 = scmp.le.s32.totalorder 1, %s23
      %p281 = scmp.lt.s32.totalorder %s23, 3
      %p282 = pnand %p280, %p281
      %p283 = pneg %p282
      // Predicated region
      $region37: #{tpu_custom_call.1} parent=5 // pred_check
        _
      $region38: #{tpu_custom_call.1} parent=5 // pred_check_branch
        %285 = sbr.rel (%p282) target = $region40
      $region39: #{tpu_custom_call.1} parent=5 // pred_region
        %s286 = ssub.s32 %s23, 1
        %s287 = sand.u32 %s36, 1
        %s288 = scalar_lea.sflag [#allocation3], %s287
        %s289 = sand.u32 %s36, 1
        %s290 = smul.addr %s289, 8
        %s291 = scalar_lea.vmem [#allocation2], %s290
        // Predicated region
        $region41: #{tpu_custom_call.1} parent=39 // pred_check
          %p292 = pneg %p49
        $region42: #{tpu_custom_call.1} parent=39 // pred_check_branch
          %294 = sbr.rel (%p292) target = $region44
        $region43: #{tpu_custom_call.1} parent=39 // pred_region
          %295 = dma.done %s288, 128
        $region44: #{tpu_custom_call.1} parent=39 // pred_fallthru
          _
        %s296 = sand.u32 %s28, 1
        %s297 = scalar_lea.sflag [#allocation6], %s296
        %s298 = sand.u32 %s62, 1
        %s299 = smul.addr %s298, 32
        %s300 = scalar_lea.vmem [#allocation5], %s299
        // Predicated region
        $region45: #{tpu_custom_call.1} parent=39 // pred_check
          %p301 = pneg %p75
        $region46: #{tpu_custom_call.1} parent=39 // pred_check_branch
          %303 = sbr.rel (%p301) target = $region48
        $region47: #{tpu_custom_call.1} parent=39 // pred_region
          %304 = dma.done %s297, 512
        $region48: #{tpu_custom_call.1} parent=39 // pred_fallthru
          _
        // Predicated region
        $region49: #{tpu_custom_call.1} parent=39 // pred_check
          %p305 = pneg %p96
        $region50: #{tpu_custom_call.1} parent=39 // pred_check_branch
          %307 = sbr.rel (%p305) target = $region52
        $region51: #{tpu_custom_call.1} parent=39 // pred_region
          %308 = dma.done [#allocation6], 1024
        $region52: #{tpu_custom_call.1} parent=39 // pred_fallthru
          _
        // Predicated region
        $region53: #{tpu_custom_call.1} parent=39 // pred_check
          %p309 = pneg %p117
        $region54: #{tpu_custom_call.1} parent=39 // pred_check_branch
          %311 = sbr.rel (%p309) target = $region56
        $region55: #{tpu_custom_call.1} parent=39 // pred_region
          %312 = dma.done [#allocation9], 1024
        $region56: #{tpu_custom_call.1} parent=39 // pred_fallthru
          _
        %s313 = sand.u32 %s36, 1
        %s314 = scalar_lea.sflag [#allocation3], %s313
        %s315 = sand.u32 %s36, 1
        %s316 = smul.addr %s315, 8
        %s317 = scalar_lea.vmem [#allocation2], %s316
        %p318 = pneg %p49
        %p319 = pneg %p46
        %s320 = sand.u32 %s28, 1
        %s321 = scalar_lea.sflag [#allocation6], %s320
        %s322 = sand.u32 %s62, 1
        %s323 = smul.addr %s322, 32
        %s324 = scalar_lea.vmem [#allocation5], %s323
        %p325 = pneg %p75
        %p326 = pneg %p72
        %p327 = pneg %p96
        %p328 = pneg %p93
        %p329 = pneg %p117
        %p330 = pneg %p114
        %p331 = pneg %p138
        %p332 = pneg %p135
        %p333 = pneg %p164
        %p334 = pneg %p161
        %s335 = sand.u32 %s151, 1
        %s336 = scalar_lea.sflag [#allocation4], %s335
        %s337 = sand.u32 %s151, 1
        %s338 = smul.addr %s337, 8
        %s339 = scalar_lea.vmem [#allocation10], %s338
        %p340 = pneg %p190
        %p341 = pneg %p187
        %p342 = scmp.lt.s32.totalorder %s28, 1
        %s343 = scalar_select %p342, %s28, 1
        %s344 = smul.addr %s343, 8
        %s345 = scalar_lea.vmem %s6, %s344
        %s346 = smul.u32 8, %s28
        %s347 = smul.u32 8, %s28
        %p348 = scmp.lt.s32.totalorder %s28, 1
        %s349 = scalar_select %p348, %s28, 1
        %s350 = smul.addr %s349, 8
        %s351 = scalar_lea.vmem %s6, %s350
        %v353 = vld [vmem:[%s291] sm:$0x1]
        %v354 = vld [vmem:[%s291 + $0x1] sm:$0x1]
        %v355 = vld [vmem:[%s291 + $0x2] sm:$0x1]
        %v356 = vld [vmem:[%s291 + $0x3] sm:$0x1]
        %v357 = vld [vmem:[%s291 + $0x4] sm:$0x1]
        %v358 = vld [vmem:[%s291 + $0x5] sm:$0x1]
        %v359 = vld [vmem:[%s291 + $0x6] sm:$0x1]
        %v360 = vld [vmem:[%s291 + $0x7] sm:$0x1]
        %v361 = vld [vmem:[#allocation7] sm:$0xf]
        %v362 = vld [vmem:[#allocation7 + $0x4] sm:$0xf]
        %v363 = vld [vmem:[#allocation7 + $0x8] sm:$0xf]
        %v364 = vld [vmem:[#allocation7 + $0xc] sm:$0xf]
        %v365 = vld [vmem:[#allocation7 + $0x10] sm:$0xf]
        %v366 = vld [vmem:[#allocation7 + $0x14] sm:$0xf]
        %v367 = vld [vmem:[#allocation7 + $0x18] sm:$0xf]
        %v368 = vld [vmem:[#allocation7 + $0x1c] sm:$0xf]
        %v369 = vld [vmem:[#allocation7 + $0x20] sm:$0xf]
        %v370 = vld [vmem:[#allocation7 + $0x24] sm:$0xf]
        %v371 = vld [vmem:[#allocation7 + $0x28] sm:$0xf]
        %v372 = vld [vmem:[#allocation7 + $0x2c] sm:$0xf]
        %v373 = vld [vmem:[#allocation7 + $0x30] sm:$0xf]
        %v374 = vld [vmem:[#allocation7 + $0x34] sm:$0xf]
        %v375 = vld [vmem:[#allocation7 + $0x38] sm:$0xf]
        %v376 = vld [vmem:[#allocation7 + $0x3c] sm:$0xf]
        %v386 = vunpack.c.l.s4 1966171168
        %v387 = vunpack.c.0.s8 %v386
        %v388 = vlaneseq
        %v389 = vshrl.u32 %v388, 7
        %v390 = vsub.s32 %v387, %v389
        %v391 = vrot.slane %v353, %v390
        %v393 = vunpack.c.l.s4 1966171168
        %v394 = vunpack.c.0.s8 %v393
        %v395 = vlaneseq
        %v396 = vshrl.u32 %v395, 7
        %v397 = vsub.s32 %v394, %v396
        %v398 = vrot.slane %v391, %v397
        %v400 = vunpack.c.l.s4 1966171168
        %v401 = vunpack.c.0.s8 %v400
        %v402 = vlaneseq
        %v403 = vshrl.u32 %v402, 7
        %v404 = vsub.s32 %v401, %v403
        %v405 = vrot.slane %v354, %v404
        %v407 = vunpack.c.l.s4 1966171168
        %v408 = vunpack.c.0.s8 %v407
        %v409 = vlaneseq
        %v410 = vshrl.u32 %v409, 7
        %v411 = vsub.s32 %v408, %v410
        %v412 = vrot.slane %v405, %v411
        %v414 = vunpack.c.l.s4 1966171168
        %v415 = vunpack.c.0.s8 %v414
        %v416 = vlaneseq
        %v417 = vshrl.u32 %v416, 7
        %v418 = vsub.s32 %v415, %v417
        %v419 = vrot.slane %v355, %v418
        %v421 = vunpack.c.l.s4 1966171168
        %v422 = vunpack.c.0.s8 %v421
        %v423 = vlaneseq
        %v424 = vshrl.u32 %v423, 7
        %v425 = vsub.s32 %v422, %v424
        %v426 = vrot.slane %v419, %v425
        %v428 = vunpack.c.l.s4 1966171168
        %v429 = vunpack.c.0.s8 %v428
        %v430 = vlaneseq
        %v431 = vshrl.u32 %v430, 7
        %v432 = vsub.s32 %v429, %v431
        %v433 = vrot.slane %v356, %v432
        %v435 = vunpack.c.l.s4 1966171168
        %v436 = vunpack.c.0.s8 %v435
        %v437 = vlaneseq
        %v438 = vshrl.u32 %v437, 7
        %v439 = vsub.s32 %v436, %v438
        %v440 = vrot.slane %v433, %v439
        %v442 = vunpack.c.l.s4 1966171168
        %v443 = vunpack.c.0.s8 %v442
        %v444 = vlaneseq
        %v445 = vshrl.u32 %v444, 7
        %v446 = vsub.s32 %v443, %v445
        %v447 = vrot.slane %v357, %v446
        %v449 = vunpack.c.l.s4 1966171168
        %v450 = vunpack.c.0.s8 %v449
        %v451 = vlaneseq
        %v452 = vshrl.u32 %v451, 7
        %v453 = vsub.s32 %v450, %v452
        %v454 = vrot.slane %v447, %v453
        %v456 = vunpack.c.l.s4 1966171168
        %v457 = vunpack.c.0.s8 %v456
        %v458 = vlaneseq
        %v459 = vshrl.u32 %v458, 7
        %v460 = vsub.s32 %v457, %v459
        %v461 = vrot.slane %v358, %v460
        %v463 = vunpack.c.l.s4 1966171168
        %v464 = vunpack.c.0.s8 %v463
        %v465 = vlaneseq
        %v466 = vshrl.u32 %v465, 7
        %v467 = vsub.s32 %v464, %v466
        %v468 = vrot.slane %v461, %v467
        %v470 = vunpack.c.l.s4 1966171168
        %v471 = vunpack.c.0.s8 %v470
        %v472 = vlaneseq
        %v473 = vshrl.u32 %v472, 7
        %v474 = vsub.s32 %v471, %v473
        %v475 = vrot.slane %v359, %v474
        %v477 = vunpack.c.l.s4 1966171168
        %v478 = vunpack.c.0.s8 %v477
        %v479 = vlaneseq
        %v480 = vshrl.u32 %v479, 7
        %v481 = vsub.s32 %v478, %v480
        %v482 = vrot.slane %v475, %v481
        %v484 = vunpack.c.l.s4 1966171168
        %v485 = vunpack.c.0.s8 %v484
        %v486 = vlaneseq
        %v487 = vshrl.u32 %v486, 7
        %v488 = vsub.s32 %v485, %v487
        %v489 = vrot.slane %v360, %v488
        %v491 = vunpack.c.l.s4 1966171168
        %v492 = vunpack.c.0.s8 %v491
        %v493 = vlaneseq
        %v494 = vshrl.u32 %v493, 7
        %v495 = vsub.s32 %v492, %v494
        %v496 = vrot.slane %v489, %v495
        %v497 = vunpack.c.l.b16 %v398
        %v498 = vunpack.c.l.b16 %v412
        %v499 = vunpack.c.l.b16 %v426
        %v500 = vunpack.c.l.b16 %v440
        %v501 = vunpack.c.l.b16 %v454
        %v502 = vunpack.c.l.b16 %v468
        %v503 = vunpack.c.l.b16 %v482
        %v504 = vunpack.c.l.b16 %v496
        %v505 = vrot.slane %v497, 1
        %vm506 = vcmask 1041409
        %v507 = vsel %vm506, %v498, %v505
        %v508 = vrot.slane %v499, 7
        %vm509 = vcmask 1042434
        %v510 = vsel %vm509, %v508, %v507
        %v511 = vrot.slane %v500, 6
        %vm512 = vcmask 1043459
        %v513 = vsel %vm512, %v511, %v510
        %v514 = vrot.slane %v501, 5
        %vm515 = vcmask 1044484
        %v516 = vsel %vm515, %v514, %v513
        %v517 = vrot.slane %v502, 4
        %vm518 = vcmask 1045509
        %v519 = vsel %vm518, %v517, %v516
        %v520 = vrot.slane %v503, 3
        %vm521 = vcmask 1046534
        %v522 = vsel %vm521, %v520, %v519
        %v523 = vrot.slane %v504, 2
        %vm524 = vcmask 1047559
        %v525 = vsel %vm524, %v523, %v522
        %v526 = vpack.c.b16 %v525, %v525
        %v535 = vunpack.c.l.b16 %v369
        %v536 = vunpack.c.l.b16 %v370
        %v537 = vunpack.c.l.b16 %v371
        %v538 = vunpack.c.l.b16 %v372
        %v539 = vunpack.c.l.b16 %v373
        %v540 = vunpack.c.l.b16 %v374
        %v541 = vunpack.c.l.b16 %v375
        %v542 = vunpack.c.l.b16 %v376
        %v543 = vpack.c.b16 %v536, %v535
        %v544 = vpack.c.b16 %v538, %v537
        %v545 = vpack.c.b16 %v540, %v539
        %v546 = vpack.c.b16 %v542, %v541
        %vm551 = vcmask 523264
        %v553 = vsel %vm551, %v526, 0
        %555 = vmatprep.subr.bf16.mxu0 0
        %556 = vmatpush1.bf16.msra.mxu0 %v543
        %557 = vmatprep.subr.bf16.mxu0 0
        %558 = vmatpush1.bf16.msra.mxu0 %v544
        %559 = vmatprep.subr.bf16.mxu0 0
        %560 = vmatpush1.bf16.msra.mxu0 %v545
        %561 = vmatprep.subr.bf16.mxu0 0
        %562 = vmatpush1.bf16.msra.mxu0 %v546
        %563 = vmatprep.subr.bf16.mxu0 0
        %564 = vmatpush1.bf16.msra.mxu0 0
        %565 = vmatprep.subr.bf16.mxu0 0
        %566 = vmatpush1.bf16.msra.mxu0 0
        %567 = vmatprep.subr.bf16.mxu0 0
        %568 = vmatpush1.bf16.msra.mxu0 0
        %569 = vmatprep.subr.bf16.mxu0 0
        %570 = vmatpush1.bf16.msra.mxu0 0
        %571 = vmatprep.subr.bf16.mxu0 0
        %572 = vmatpush1.bf16.msra.mxu0 0
        %573 = vmatprep.subr.bf16.mxu0 0
        %574 = vmatpush1.bf16.msra.mxu0 0
        %575 = vmatprep.subr.bf16.mxu0 0
        %576 = vmatpush1.bf16.msra.mxu0 0
        %577 = vmatprep.subr.bf16.mxu0 0
        %578 = vmatpush1.bf16.msra.mxu0 0
        %579 = vmatprep.subr.bf16.mxu0 0
        %580 = vmatpush1.bf16.msra.mxu0 0
        %581 = vmatprep.subr.bf16.mxu0 0
        %582 = vmatpush1.bf16.msra.mxu0 0
        %583 = vmatprep.subr.bf16.mxu0 0
        %584 = vmatpush1.bf16.msra.mxu0 0
        %585 = vmatprep.subr.bf16.mxu0 0
        %586 = vmatpush1.bf16.msra.mxu0 0
        %587 = vmatprep.mubr.bf16.mxu0 0
        %588 = vmatmul.mubr.bf16.gmra.mrb[0].mxu0 %v553
        %v589 = vpop.f32.mrb[0].mxu0
        %v590 = vadd.f32 0.0, %v589
        %v591 = vpop.f32.mrb[0].mxu0
        %v592 = vpop.f32.mrb[0].mxu0
        %v593 = vpop.f32.mrb[0].mxu0
        %594 = vdwg.mxu0
        %v595 = vrot.slane %v498, 7
        %v596 = vsel %vm506, %v595, %v497
        %v597 = vrot.slane %v499, 6
        %v598 = vsel %vm509, %v597, %v596
        %v599 = vrot.slane %v500, 5
        %v600 = vsel %vm512, %v599, %v598
        %v601 = vrot.slane %v501, 4
        %v602 = vsel %vm515, %v601, %v600
        %v603 = vrot.slane %v502, 3
        %v604 = vsel %vm518, %v603, %v602
        %v605 = vrot.slane %v503, 2
        %v606 = vsel %vm521, %v605, %v604
        %v607 = vrot.slane %v504, 1
        %v608 = vsel %vm524, %v607, %v606
        %v609 = vpack.c.b16 %v608, %v608
        %v618 = vunpack.c.l.b16 %v361
        %v619 = vunpack.c.l.b16 %v362
        %v620 = vunpack.c.l.b16 %v363
        %v621 = vunpack.c.l.b16 %v364
        %v622 = vunpack.c.l.b16 %v365
        %v623 = vunpack.c.l.b16 %v366
        %v624 = vunpack.c.l.b16 %v367
        %v625 = vunpack.c.l.b16 %v368
        %v626 = vpack.c.b16 %v619, %v618
        %v627 = vpack.c.b16 %v621, %v620
        %v628 = vpack.c.b16 %v623, %v622
        %v629 = vpack.c.b16 %v625, %v624
        %v635 = vsel %vm551, %v609, 0
        %637 = vmatprep.subr.bf16.mxu0 0
        %638 = vmatpush1.bf16.msra.mxu0 %v626
        %639 = vmatprep.subr.bf16.mxu0 0
        %640 = vmatpush1.bf16.msra.mxu0 %v627
        %641 = vmatprep.subr.bf16.mxu0 0
        %642 = vmatpush1.bf16.msra.mxu0 %v628
        %643 = vmatprep.subr.bf16.mxu0 0
        %644 = vmatpush1.bf16.msra.mxu0 %v629
        %645 = vmatprep.subr.bf16.mxu0 0
        %646 = vmatpush1.bf16.msra.mxu0 0
        %647 = vmatprep.subr.bf16.mxu0 0
        %648 = vmatpush1.bf16.msra.mxu0 0
        %649 = vmatprep.subr.bf16.mxu0 0
        %650 = vmatpush1.bf16.msra.mxu0 0
        %651 = vmatprep.subr.bf16.mxu0 0
        %652 = vmatpush1.bf16.msra.mxu0 0
        %653 = vmatprep.subr.bf16.mxu0 0
        %654 = vmatpush1.bf16.msra.mxu0 0
        %655 = vmatprep.subr.bf16.mxu0 0
        %656 = vmatpush1.bf16.msra.mxu0 0
        %657 = vmatprep.subr.bf16.mxu0 0
        %658 = vmatpush1.bf16.msra.mxu0 0
        %659 = vmatprep.subr.bf16.mxu0 0
        %660 = vmatpush1.bf16.msra.mxu0 0
        %661 = vmatprep.subr.bf16.mxu0 0
        %662 = vmatpush1.bf16.msra.mxu0 0
        %663 = vmatprep.subr.bf16.mxu0 0
        %664 = vmatpush1.bf16.msra.mxu0 0
        %665 = vmatprep.subr.bf16.mxu0 0
        %666 = vmatpush1.bf16.msra.mxu0 0
        %667 = vmatprep.subr.bf16.mxu0 0
        %668 = vmatpush1.bf16.msra.mxu0 0
        %669 = vmatprep.mubr.bf16.mxu0 0
        %670 = vmatmul.mubr.bf16.gmra.mrb[0].mxu0 %v635
        %v671 = vpop.f32.mrb[0].mxu0
        %v672 = vadd.f32 %v590, %v671
        %v673 = vpop.f32.mrb[0].mxu0
        %v674 = vpop.f32.mrb[0].mxu0
        %v675 = vpop.f32.mrb[0].mxu0
        %676 = vdwg.mxu0
        %v677 = vld [vmem:[%s300] sm:$0xf]
        %v678 = vld [vmem:[%s300 + $0x4] sm:$0xf]
        %v679 = vld [vmem:[%s300 + $0x8] sm:$0xf]
        %v680 = vld [vmem:[%s300 + $0xc] sm:$0xf]
        %v681 = vld [vmem:[%s300 + $0x10] sm:$0xf]
        %v682 = vld [vmem:[%s300 + $0x14] sm:$0xf]
        %v683 = vld [vmem:[%s300 + $0x18] sm:$0xf]
        %v684 = vld [vmem:[%s300 + $0x1c] sm:$0xf]
        %v685 = vld [vmem:[#allocation8] sm:$0xf]
        %v686 = vld [vmem:[#allocation8 + $0x4] sm:$0xf]
        %v687 = vld [vmem:[#allocation8 + $0x8] sm:$0xf]
        %v688 = vld [vmem:[#allocation8 + $0xc] sm:$0xf]
        %v689 = vld [vmem:[#allocation8 + $0x10] sm:$0xf]
        %v690 = vld [vmem:[#allocation8 + $0x14] sm:$0xf]
        %v691 = vld [vmem:[#allocation8 + $0x18] sm:$0xf]
        %v692 = vld [vmem:[#allocation8 + $0x1c] sm:$0xf]
        %v693 = vld [vmem:[#allocation8 + $0x20] sm:$0xf]
        %v694 = vld [vmem:[#allocation8 + $0x24] sm:$0xf]
        %v695 = vld [vmem:[#allocation8 + $0x28] sm:$0xf]
        %v696 = vld [vmem:[#allocation8 + $0x2c] sm:$0xf]
        %v697 = vld [vmem:[#allocation8 + $0x30] sm:$0xf]
        %v698 = vld [vmem:[#allocation8 + $0x34] sm:$0xf]
        %v699 = vld [vmem:[#allocation8 + $0x38] sm:$0xf]
        %v700 = vld [vmem:[#allocation8 + $0x3c] sm:$0xf]
        %v709 = vunpack.c.l.b16 %v677
        %v710 = vunpack.c.l.b16 %v678
        %v711 = vunpack.c.l.b16 %v679
        %v712 = vunpack.c.l.b16 %v680
        %v713 = vunpack.c.l.b16 %v681
        %v714 = vunpack.c.l.b16 %v682
        %v715 = vunpack.c.l.b16 %v683
        %v716 = vunpack.c.l.b16 %v684
        %v717 = vpack.c.b16 %v710, %v709
        %v718 = vpack.c.b16 %v712, %v711
        %v719 = vpack.c.b16 %v714, %v713
        %v720 = vpack.c.b16 %v716, %v715
        %v741 = vunpack.c.l.b16 %v685
        %v742 = vunpack.c.l.b16 %v686
        %v743 = vunpack.c.l.b16 %v687
        %v744 = vunpack.c.l.b16 %v688
        %v745 = vunpack.c.l.b16 %v689
        %v746 = vunpack.c.l.b16 %v690
        %v747 = vunpack.c.l.b16 %v691
        %v748 = vunpack.c.l.b16 %v692
        %v749 = vunpack.c.l.b16 %v693
        %v750 = vunpack.c.l.b16 %v694
        %v751 = vunpack.c.l.b16 %v695
        %v752 = vunpack.c.l.b16 %v696
        %v753 = vunpack.c.l.b16 %v697
        %v754 = vunpack.c.l.b16 %v698
        %v755 = vunpack.c.l.b16 %v699
        %v756 = vunpack.c.l.b16 %v700
        %v757 = vpack.c.b16 %v742, %v741
        %v758 = vpack.c.b16 %v744, %v743
        %v759 = vpack.c.b16 %v746, %v745
        %v760 = vpack.c.b16 %v748, %v747
        %v761 = vpack.c.b16 %v750, %v749
        %v762 = vpack.c.b16 %v752, %v751
        %v763 = vpack.c.b16 %v754, %v753
        %v764 = vpack.c.b16 %v756, %v755
        %773 = vmatprep.subr.bf16.mxu0 0
        %774 = vmatpush1.bf16.msra.mxu0 %v757
        %775 = vmatprep.subr.bf16.mxu0 0
        %776 = vmatpush1.bf16.msra.mxu0 %v758
        %777 = vmatprep.subr.bf16.mxu0 0
        %778 = vmatpush1.bf16.msra.mxu0 %v759
        %779 = vmatprep.subr.bf16.mxu0 0
        %780 = vmatpush1.bf16.msra.mxu0 %v760
        %781 = vmatprep.subr.bf16.mxu0 0
        %782 = vmatpush1.bf16.msra.mxu0 %v761
        %783 = vmatprep.subr.bf16.mxu0 0
        %784 = vmatpush1.bf16.msra.mxu0 %v762
        %785 = vmatprep.subr.bf16.mxu0 0
        %786 = vmatpush1.bf16.msra.mxu0 %v763
        %787 = vmatprep.subr.bf16.mxu0 0
        %788 = vmatpush1.bf16.msra.mxu0 %v764
        %789 = vmatprep.subr.bf16.mxu0 0
        %790 = vmatpush1.bf16.msra.mxu0 0
        %791 = vmatprep.subr.bf16.mxu0 0
        %792 = vmatpush1.bf16.msra.mxu0 0
        %793 = vmatprep.subr.bf16.mxu0 0
        %794 = vmatpush1.bf16.msra.mxu0 0
        %795 = vmatprep.subr.bf16.mxu0 0
        %796 = vmatpush1.bf16.msra.mxu0 0
        %797 = vmatprep.subr.bf16.mxu0 0
        %798 = vmatpush1.bf16.msra.mxu0 0
        %799 = vmatprep.subr.bf16.mxu0 0
        %800 = vmatpush1.bf16.msra.mxu0 0
        %801 = vmatprep.subr.bf16.mxu0 0
        %802 = vmatpush1.bf16.msra.mxu0 0
        %803 = vmatprep.subr.bf16.mxu0 0
        %804 = vmatpush1.bf16.msra.mxu0 0
        %805 = vmatprep.mubr.bf16.mxu0 0
        %806 = vmatmul.mubr.bf16.gmra.mrb[0].mxu0 %v717
        %v807 = vpop.f32.mrb[0].mxu0
        %v808 = vadd.f32 0.0, %v807
        %v809 = vpop.f32.mrb[0].mxu0
        %v810 = vpop.f32.mrb[0].mxu0
        %v811 = vadd.f32 0.0, %v810
        %v812 = vpop.f32.mrb[0].mxu0
        %813 = vmatprep.mubr.bf16.mxu0 0
        %814 = vmatmul.mubr.bf16.gmra.mrb[0].mxu0 %v718
        %v815 = vpop.f32.mrb[0].mxu0
        %v816 = vadd.f32 0.0, %v815
        %v817 = vpop.f32.mrb[0].mxu0
        %v818 = vpop.f32.mrb[0].mxu0
        %v819 = vadd.f32 0.0, %v818
        %v820 = vpop.f32.mrb[0].mxu0
        %821 = vmatprep.mubr.bf16.mxu0 0
        %822 = vmatmul.mubr.bf16.gmra.mrb[0].mxu0 %v719
        %v823 = vpop.f32.mrb[0].mxu0
        %v824 = vadd.f32 0.0, %v823
        %v825 = vpop.f32.mrb[0].mxu0
        %v826 = vpop.f32.mrb[0].mxu0
        %v827 = vadd.f32 0.0, %v826
        %v828 = vpop.f32.mrb[0].mxu0
        %829 = vmatprep.mubr.bf16.mxu0 0
        %830 = vmatmul.mubr.bf16.gmra.mrb[0].mxu0 %v720
        %v831 = vpop.f32.mrb[0].mxu0
        %v832 = vadd.f32 0.0, %v831
        %v833 = vpop.f32.mrb[0].mxu0
        %v834 = vpop.f32.mrb[0].mxu0
        %v835 = vadd.f32 0.0, %v834
        %v836 = vpop.f32.mrb[0].mxu0
        %837 = vdwg.mxu0
        %v839 = vcombine.high %v672, %v672
        %v841 = vunpack.c.l.s4 1966171168
        %v842 = vunpack.c.0.s8 %v841
        %v843 = vlaneseq
        %v844 = vshrl.u32 %v843, 7
        %v845 = vsub.s32 %v842, %v844
        %v846 = vrot.slane %v672, %v845
        %v848 = vunpack.c.l.s4 1966171168
        %v849 = vunpack.c.0.s8 %v848
        %v850 = vlaneseq
        %v851 = vshrl.u32 %v850, 7
        %v852 = vsub.s32 %v849, %v851
        %v853 = vrot.slane %v839, %v852
        %v854 = vcombine.high %v846, %v846
        %v855 = vcombine.high %v853, %v853
        %v857 = vunpack.c.l.s4 1966171168
        %v858 = vunpack.c.0.s8 %v857
        %v859 = vlaneseq
        %v860 = vshrl.u32 %v859, 7
        %v861 = vsub.s32 %v858, %v860
        %v862 = vrot.slane %v846, %v861
        %v864 = vunpack.c.l.s4 1966171168
        %v865 = vunpack.c.0.s8 %v864
        %v866 = vlaneseq
        %v867 = vshrl.u32 %v866, 7
        %v868 = vsub.s32 %v865, %v867
        %v869 = vrot.slane %v853, %v868
        %v871 = vunpack.c.l.s4 1966171168
        %v872 = vunpack.c.0.s8 %v871
        %v873 = vlaneseq
        %v874 = vshrl.u32 %v873, 7
        %v875 = vsub.s32 %v872, %v874
        %v876 = vrot.slane %v854, %v875
        %v878 = vunpack.c.l.s4 1966171168
        %v879 = vunpack.c.0.s8 %v878
        %v880 = vlaneseq
        %v881 = vshrl.u32 %v880, 7
        %v882 = vsub.s32 %v879, %v881
        %v883 = vrot.slane %v855, %v882
        %v884 = vcombine.high %v862, %v862
        %v885 = vcombine.high %v869, %v869
        %v886 = vcombine.high %v876, %v876
        %v887 = vcombine.high %v883, %v883
        %v888 = vlaneseq
        %v889 = vshrl.u32 %v888, 7
        %v890 = vsub.s32 0, %v889
        %v891 = vrot.slane %v862, %v890
        %v892 = vlaneseq
        %v893 = vshrl.u32 %v892, 7
        %v894 = vsub.s32 0, %v893
        %v895 = vrot.slane %v876, %v894
        %v896 = vlaneseq
        %v897 = vshrl.u32 %v896, 7
        %v898 = vsub.s32 0, %v897
        %v899 = vrot.slane %v884, %v898
        %v900 = vlaneseq
        %v901 = vshrl.u32 %v900, 7
        %v902 = vsub.s32 0, %v901
        %v903 = vrot.slane %v886, %v902
        %v904 = vlaneseq
        %v905 = vshrl.u32 %v904, 7
        %v906 = vsub.s32 0, %v905
        %v907 = vrot.slane %v869, %v906
        %v908 = vlaneseq
        %v909 = vshrl.u32 %v908, 7
        %v910 = vsub.s32 0, %v909
        %v911 = vrot.slane %v883, %v910
        %v912 = vlaneseq
        %v913 = vshrl.u32 %v912, 7
        %v914 = vsub.s32 0, %v913
        %v915 = vrot.slane %v885, %v914
        %v916 = vlaneseq
        %v917 = vshrl.u32 %v916, 7
        %v918 = vsub.s32 0, %v917
        %v919 = vrot.slane %v887, %v918
        %v928 = vadd.f32 %v891, %v808
        %v929 = vadd.f32 %v895, %v811
        %v930 = vadd.f32 %v899, %v816
        %v931 = vadd.f32 %v903, %v819
        %v932 = vadd.f32 %v907, %v824
        %v933 = vadd.f32 %v911, %v827
        %v934 = vadd.f32 %v915, %v832
        %v935 = vadd.f32 %v919, %v835
        %v936 = vtanh.pop %v928
        %v937 = vtanh.pop %v929
        %v938 = vtanh.pop %v930
        %v939 = vtanh.pop %v931
        %v940 = vtanh.pop %v932
        %v941 = vtanh.pop %v933
        %v942 = vtanh.pop %v934
        %v943 = vtanh.pop %v935
        %v944 = vld [vmem:[%s4] sm:$0x1]
        %v946 = vlaneseq
        %v947 = vshrl.u32 %v946, 7
        %v948 = vsub.s32 0, %v947
        %v949 = vrot.slane %v944, %v948
        %v951 = vmul.f32 %v936, %v949
        %v952 = vmul.f32 %v937, %v949
        %v953 = vmul.f32 %v938, %v949
        %v954 = vmul.f32 %v939, %v949
        %v955 = vmul.f32 %v940, %v949
        %v956 = vmul.f32 %v941, %v949
        %v957 = vmul.f32 %v942, %v949
        %v958 = vmul.f32 %v943, %v949
        %959 = vadd.xlane.f32.xlu0 %v951
        %v960 = vpop.xlane.xlu0 %959
        %961 = vadd.xlane.f32.xlu0 %v952
        %v962 = vpop.xlane.xlu0 %961
        %963 = vadd.xlane.f32.xlu0 %v953
        %v964 = vpop.xlane.xlu0 %963
        %965 = vadd.xlane.f32.xlu0 %v954
        %v966 = vpop.xlane.xlu0 %965
        %967 = vadd.xlane.f32.xlu0 %v955
        %v968 = vpop.xlane.xlu0 %967
        %969 = vadd.xlane.f32.xlu0 %v956
        %v970 = vpop.xlane.xlu0 %969
        %971 = vadd.xlane.f32.xlu0 %v957
        %v972 = vpop.xlane.xlu0 %971
        %973 = vadd.xlane.f32.xlu0 %v958
        %v974 = vpop.xlane.xlu0 %973
        %v983 = vlaneseq
        %v984 = vand.u32 %v983, 127
        %v985 = vlaneseq
        %v986 = vshrl.u32 %v985, 7
        %v987 = vsub.s32 %v984, %v986
        %v988 = vrot.slane %v960, %v987
        %v989 = vlaneseq
        %v990 = vshrl.u32 %v989, 7
        %v991 = vsub.s32 %v984, %v990
        %v992 = vrot.slane %v962, %v991
        %v993 = vlaneseq
        %v994 = vshrl.u32 %v993, 7
        %v995 = vsub.s32 %v984, %v994
        %v996 = vrot.slane %v964, %v995
        %v997 = vlaneseq
        %v998 = vshrl.u32 %v997, 7
        %v999 = vsub.s32 %v984, %v998
        %v1000 = vrot.slane %v966, %v999
        %v1001 = vlaneseq
        %v1002 = vshrl.u32 %v1001, 7
        %v1003 = vsub.s32 %v984, %v1002
        %v1004 = vrot.slane %v968, %v1003
        %v1005 = vlaneseq
        %v1006 = vshrl.u32 %v1005, 7
        %v1007 = vsub.s32 %v984, %v1006
        %v1008 = vrot.slane %v970, %v1007
        %v1009 = vlaneseq
        %v1010 = vshrl.u32 %v1009, 7
        %v1011 = vsub.s32 %v984, %v1010
        %v1012 = vrot.slane %v972, %v1011
        %v1013 = vlaneseq
        %v1014 = vshrl.u32 %v1013, 7
        %v1015 = vsub.s32 %v984, %v1014
        %v1016 = vrot.slane %v974, %v1015
        %v1017 = vsel %vm506, %v992, %v988
        %v1018 = vsel %vm509, %v996, %v1017
        %v1019 = vsel %vm512, %v1000, %v1018
        %v1020 = vsel %vm515, %v1004, %v1019
        %v1021 = vsel %vm518, %v1008, %v1020
        %v1022 = vsel %vm521, %v1012, %v1021
        %v1023 = vsel %vm524, %v1016, %v1022
        %vm1025 = vcmask 64512
        %v1026 = vsel %vm1025, %v1023, -inf
        %1027 = vmax.xlane.f32.xlu0 %v1026
        %v1028 = vpop.xlane.xlu0 %1027
        %v1030 = vlaneseq
        %v1031 = vshrl.u32 %v1030, 7
        %v1032 = vsub.s32 0, %v1031
        %v1033 = vrot.slane %v1028, %v1032
        %v1034 = vlaneseq
        %v1035 = vshrl.u32 %v1034, 7
        %v1036 = vsub.s32 1, %v1035
        %v1037 = vrot.slane %v1028, %v1036
        %v1038 = vlaneseq
        %v1039 = vshrl.u32 %v1038, 7
        %v1040 = vsub.s32 2, %v1039
        %v1041 = vrot.slane %v1028, %v1040
        %v1042 = vlaneseq
        %v1043 = vshrl.u32 %v1042, 7
        %v1044 = vsub.s32 3, %v1043
        %v1045 = vrot.slane %v1028, %v1044
        %v1046 = vlaneseq
        %v1047 = vshrl.u32 %v1046, 7
        %v1048 = vsub.s32 4, %v1047
        %v1049 = vrot.slane %v1028, %v1048
        %v1050 = vlaneseq
        %v1051 = vshrl.u32 %v1050, 7
        %v1052 = vsub.s32 5, %v1051
        %v1053 = vrot.slane %v1028, %v1052
        %v1054 = vlaneseq
        %v1055 = vshrl.u32 %v1054, 7
        %v1056 = vsub.s32 6, %v1055
        %v1057 = vrot.slane %v1028, %v1056
        %v1058 = vlaneseq
        %v1059 = vshrl.u32 %v1058, 7
        %v1060 = vsub.s32 7, %v1059
        %v1061 = vrot.slane %v1028, %v1060
        %v1070 = vsub.f32 %v960, %v1033
        %v1071 = vsub.f32 %v962, %v1037
        %v1072 = vsub.f32 %v964, %v1041
        %v1073 = vsub.f32 %v966, %v1045
        %v1074 = vsub.f32 %v968, %v1049
        %v1075 = vsub.f32 %v970, %v1053
        %v1076 = vsub.f32 %v972, %v1057
        %v1077 = vsub.f32 %v974, %v1061
        %v1078 = vmul.f32 %v1070, 1.442695
        %v1079 = vpow.pop %v1078
        %v1080 = vmul.f32 %v1071, 1.442695
        %v1081 = vpow.pop %v1080
        %v1082 = vmul.f32 %v1072, 1.442695
        %v1083 = vpow.pop %v1082
        %v1084 = vmul.f32 %v1073, 1.442695
        %v1085 = vpow.pop %v1084
        %v1086 = vmul.f32 %v1074, 1.442695
        %v1087 = vpow.pop %v1086
        %v1088 = vmul.f32 %v1075, 1.442695
        %v1089 = vpow.pop %v1088
        %v1090 = vmul.f32 %v1076, 1.442695
        %v1091 = vpow.pop %v1090
        %v1092 = vmul.f32 %v1077, 1.442695
        %v1093 = vpow.pop %v1092
        %1102 = vset.pattern.permute.xlu0 0
        %1103 = vperm.xlu0 %1102, %v1079
        %v1104 = vpop.permute.xlu0 %1103
        %1105 = vset.pattern.permute.xlu0 0
        %1106 = vperm.xlu0 %1105, %v1081
        %v1107 = vpop.permute.xlu0 %1106
        %1108 = vset.pattern.permute.xlu0 0
        %1109 = vperm.xlu0 %1108, %v1083
        %v1110 = vpop.permute.xlu0 %1109
        %1111 = vset.pattern.permute.xlu0 0
        %1112 = vperm.xlu0 %1111, %v1085
        %v1113 = vpop.permute.xlu0 %1112
        %1114 = vset.pattern.permute.xlu0 0
        %1115 = vperm.xlu0 %1114, %v1087
        %v1116 = vpop.permute.xlu0 %1115
        %1117 = vset.pattern.permute.xlu0 0
        %1118 = vperm.xlu0 %1117, %v1089
        %v1119 = vpop.permute.xlu0 %1118
        %1120 = vset.pattern.permute.xlu0 0
        %1121 = vperm.xlu0 %1120, %v1091
        %v1122 = vpop.permute.xlu0 %1121
        %1123 = vset.pattern.permute.xlu0 0
        %1124 = vperm.xlu0 %1123, %v1093
        %v1125 = vpop.permute.xlu0 %1124
        %v1126 = vlaneseq
        %v1127 = vshrl.u32 %v1126, 7
        %v1128 = vsub.s32 %v984, %v1127
        %v1129 = vrot.slane %v1104, %v1128
        %v1130 = vlaneseq
        %v1131 = vshrl.u32 %v1130, 7
        %v1132 = vsub.s32 %v984, %v1131
        %v1133 = vrot.slane %v1107, %v1132
        %v1134 = vlaneseq
        %v1135 = vshrl.u32 %v1134, 7
        %v1136 = vsub.s32 %v984, %v1135
        %v1137 = vrot.slane %v1110, %v1136
        %v1138 = vlaneseq
        %v1139 = vshrl.u32 %v1138, 7
        %v1140 = vsub.s32 %v984, %v1139
        %v1141 = vrot.slane %v1113, %v1140
        %v1142 = vlaneseq
        %v1143 = vshrl.u32 %v1142, 7
        %v1144 = vsub.s32 %v984, %v1143
        %v1145 = vrot.slane %v1116, %v1144
        %v1146 = vlaneseq
        %v1147 = vshrl.u32 %v1146, 7
        %v1148 = vsub.s32 %v984, %v1147
        %v1149 = vrot.slane %v1119, %v1148
        %v1150 = vlaneseq
        %v1151 = vshrl.u32 %v1150, 7
        %v1152 = vsub.s32 %v984, %v1151
        %v1153 = vrot.slane %v1122, %v1152
        %v1154 = vlaneseq
        %v1155 = vshrl.u32 %v1154, 7
        %v1156 = vsub.s32 %v984, %v1155
        %v1157 = vrot.slane %v1125, %v1156
        %v1158 = vsel %vm506, %v1133, %v1129
        %v1159 = vsel %vm509, %v1137, %v1158
        %v1160 = vsel %vm512, %v1141, %v1159
        %v1161 = vsel %vm515, %v1145, %v1160
        %v1162 = vsel %vm518, %v1149, %v1161
        %v1163 = vsel %vm521, %v1153, %v1162
        %v1164 = vsel %vm524, %v1157, %v1163
        %v1166 = vsel %vm1025, %v1164, 0.0
        %1167 = vadd.xlane.f32.xlu0 %v1166
        %v1168 = vpop.xlane.xlu0 %1167
        %v1169 = vrcp.pop %v1168
        %v1170 = vmul.f32 %v1168, %v1169
        %v1171 = vsub.f32 2.0, %v1170
        %v1172 = vmul.f32 %v1169, %v1171
        %v1174 = vlaneseq
        %v1175 = vshrl.u32 %v1174, 7
        %v1176 = vsub.s32 0, %v1175
        %v1177 = vrot.slane %v1172, %v1176
        %v1178 = vlaneseq
        %v1179 = vshrl.u32 %v1178, 7
        %v1180 = vsub.s32 1, %v1179
        %v1181 = vrot.slane %v1172, %v1180
        %v1182 = vlaneseq
        %v1183 = vshrl.u32 %v1182, 7
        %v1184 = vsub.s32 2, %v1183
        %v1185 = vrot.slane %v1172, %v1184
        %v1186 = vlaneseq
        %v1187 = vshrl.u32 %v1186, 7
        %v1188 = vsub.s32 3, %v1187
        %v1189 = vrot.slane %v1172, %v1188
        %v1190 = vlaneseq
        %v1191 = vshrl.u32 %v1190, 7
        %v1192 = vsub.s32 4, %v1191
        %v1193 = vrot.slane %v1172, %v1192
        %v1194 = vlaneseq
        %v1195 = vshrl.u32 %v1194, 7
        %v1196 = vsub.s32 5, %v1195
        %v1197 = vrot.slane %v1172, %v1196
        %v1198 = vlaneseq
        %v1199 = vshrl.u32 %v1198, 7
        %v1200 = vsub.s32 6, %v1199
        %v1201 = vrot.slane %v1172, %v1200
        %v1202 = vlaneseq
        %v1203 = vshrl.u32 %v1202, 7
        %v1204 = vsub.s32 7, %v1203
        %v1205 = vrot.slane %v1172, %v1204
        %v1214 = vmul.f32 %v1079, %v1177
        %v1215 = vmul.f32 %v1081, %v1181
        %v1216 = vmul.f32 %v1083, %v1185
        %v1217 = vmul.f32 %v1085, %v1189
        %v1218 = vmul.f32 %v1087, %v1193
        %v1219 = vmul.f32 %v1089, %v1197
        %v1220 = vmul.f32 %v1091, %v1201
        %v1221 = vmul.f32 %v1093, %v1205
        %v1222 = vunpack.c.l.bf16 %v677
        %v1223 = vunpack.c.l.bf16 %v678
        %v1224 = vunpack.c.l.bf16 %v679
        %v1225 = vunpack.c.l.bf16 %v680
        %v1226 = vunpack.c.l.bf16 %v681
        %v1227 = vunpack.c.l.bf16 %v682
        %v1228 = vunpack.c.l.bf16 %v683
        %v1229 = vunpack.c.l.bf16 %v684
        %1231 = vset.pattern.permute.xlu0 0
        %1232 = vperm.xlu0 %1231, %v1214
        %v1233 = vpop.permute.xlu0 %1232
        %1236 = vset.pattern.permute.xlu0 0
        %1237 = vperm.xlu0 %1236, %v1215
        %v1238 = vpop.permute.xlu0 %1237
        %1241 = vset.pattern.permute.xlu0 0
        %1242 = vperm.xlu0 %1241, %v1216
        %v1243 = vpop.permute.xlu0 %1242
        %1246 = vset.pattern.permute.xlu0 0
        %1247 = vperm.xlu0 %1246, %v1217
        %v1248 = vpop.permute.xlu0 %1247
        %1251 = vset.pattern.permute.xlu0 0
        %1252 = vperm.xlu0 %1251, %v1218
        %v1253 = vpop.permute.xlu0 %1252
        %1256 = vset.pattern.permute.xlu0 0
        %1257 = vperm.xlu0 %1256, %v1219
        %v1258 = vpop.permute.xlu0 %1257
        %1261 = vset.pattern.permute.xlu0 0
        %1262 = vperm.xlu0 %1261, %v1220
        %v1263 = vpop.permute.xlu0 %1262
        %1266 = vset.pattern.permute.xlu0 0
        %1267 = vperm.xlu0 %1266, %v1221
        %v1268 = vpop.permute.xlu0 %1267
        %v1270 = vmul.f32 %v1233, %v1222
        %v1271 = vmul.f32 %v1238, %v1223
        %v1272 = vmul.f32 %v1243, %v1224
        %v1273 = vmul.f32 %v1248, %v1225
        %v1274 = vmul.f32 %v1253, %v1226
        %v1275 = vmul.f32 %v1258, %v1227
        %v1276 = vmul.f32 %v1263, %v1228
        %v1277 = vmul.f32 %v1268, %v1229
        %v1278 = vrot.slane %v1270, 4
        %v1279 = vadd.f32 %v1270, %v1278
        %v1280 = vrot.slane %v1279, 2
        %v1281 = vadd.f32 %v1279, %v1280
        %v1282 = vrot.slane %v1281, 1
        %v1283 = vadd.f32 %v1281, %v1282
        %v1284 = vrot.slane %v1271, 4
        %v1285 = vadd.f32 %v1271, %v1284
        %v1286 = vrot.slane %v1285, 2
        %v1287 = vadd.f32 %v1285, %v1286
        %v1288 = vrot.slane %v1287, 1
        %v1289 = vadd.f32 %v1287, %v1288
        %v1290 = vrot.slane %v1272, 4
        %v1291 = vadd.f32 %v1272, %v1290
        %v1292 = vrot.slane %v1291, 2
        %v1293 = vadd.f32 %v1291, %v1292
        %v1294 = vrot.slane %v1293, 1
        %v1295 = vadd.f32 %v1293, %v1294
        %v1296 = vrot.slane %v1273, 4
        %v1297 = vadd.f32 %v1273, %v1296
        %v1298 = vrot.slane %v1297, 2
        %v1299 = vadd.f32 %v1297, %v1298
        %v1300 = vrot.slane %v1299, 1
        %v1301 = vadd.f32 %v1299, %v1300
        %v1302 = vrot.slane %v1274, 4
        %v1303 = vadd.f32 %v1274, %v1302
        %v1304 = vrot.slane %v1303, 2
        %v1305 = vadd.f32 %v1303, %v1304
        %v1306 = vrot.slane %v1305, 1
        %v1307 = vadd.f32 %v1305, %v1306
        %v1308 = vrot.slane %v1275, 4
        %v1309 = vadd.f32 %v1275, %v1308
        %v1310 = vrot.slane %v1309, 2
        %v1311 = vadd.f32 %v1309, %v1310
        %v1312 = vrot.slane %v1311, 1
        %v1313 = vadd.f32 %v1311, %v1312
        %v1314 = vrot.slane %v1276, 4
        %v1315 = vadd.f32 %v1276, %v1314
        %v1316 = vrot.slane %v1315, 2
        %v1317 = vadd.f32 %v1315, %v1316
        %v1318 = vrot.slane %v1317, 1
        %v1319 = vadd.f32 %v1317, %v1318
        %v1320 = vrot.slane %v1277, 4
        %v1321 = vadd.f32 %v1277, %v1320
        %v1322 = vrot.slane %v1321, 2
        %v1323 = vadd.f32 %v1321, %v1322
        %v1324 = vrot.slane %v1323, 1
        %v1325 = vadd.f32 %v1323, %v1324
        %v1334 = vsel %vm506, %v1289, %v1283
        %v1335 = vsel %vm509, %v1295, %v1334
        %v1336 = vsel %vm512, %v1301, %v1335
        %v1337 = vsel %vm515, %v1307, %v1336
        %v1338 = vsel %vm518, %v1313, %v1337
        %v1339 = vsel %vm521, %v1319, %v1338
        %v1340 = vsel %vm524, %v1325, %v1339
        %1342 = vst [vmem:[%s339] sm:$0xff] %v1340
        %v1343 = vlaneseq
        %v1344 = vshrl.u32 %v1343, 7
        %v1345 = vsub.s32 %v984, %v1344
        %v1346 = vrot.slane %v1233, %v1345
        %v1347 = vlaneseq
        %v1348 = vshrl.u32 %v1347, 7
        %v1349 = vsub.s32 %v984, %v1348
        %v1350 = vrot.slane %v1238, %v1349
        %v1351 = vlaneseq
        %v1352 = vshrl.u32 %v1351, 7
        %v1353 = vsub.s32 %v984, %v1352
        %v1354 = vrot.slane %v1243, %v1353
        %v1355 = vlaneseq
        %v1356 = vshrl.u32 %v1355, 7
        %v1357 = vsub.s32 %v984, %v1356
        %v1358 = vrot.slane %v1248, %v1357
        %v1359 = vlaneseq
        %v1360 = vshrl.u32 %v1359, 7
        %v1361 = vsub.s32 %v984, %v1360
        %v1362 = vrot.slane %v1253, %v1361
        %v1363 = vlaneseq
        %v1364 = vshrl.u32 %v1363, 7
        %v1365 = vsub.s32 %v984, %v1364
        %v1366 = vrot.slane %v1258, %v1365
        %v1367 = vlaneseq
        %v1368 = vshrl.u32 %v1367, 7
        %v1369 = vsub.s32 %v984, %v1368
        %v1370 = vrot.slane %v1263, %v1369
        %v1371 = vlaneseq
        %v1372 = vshrl.u32 %v1371, 7
        %v1373 = vsub.s32 %v984, %v1372
        %v1374 = vrot.slane %v1268, %v1373
        %v1375 = vsel %vm506, %v1350, %v1346
        %v1376 = vsel %vm509, %v1354, %v1375
        %v1377 = vsel %vm512, %v1358, %v1376
        %v1378 = vsel %vm515, %v1362, %v1377
        %v1379 = vsel %vm518, %v1366, %v1378
        %v1380 = vsel %vm521, %v1370, %v1379
        %v1381 = vsel %vm524, %v1374, %v1380
        %1383 = vst.msk [vmem:[%s351] sm:$0xff] %vm1025, %v1381
        %s1384 = sand.u32 %s151, 1
        %s1385 = scalar_lea.sflag [#allocation4], %s1384
        %s1386 = sand.u32 %s151, 1
        %s1387 = smul.addr %s1386, 8
        %s1388 = scalar_lea.vmem [#allocation10], %s1387
        %p1389 = scmp.lt.s32.totalorder %s28, 1
        %s1390 = scalar_select %p1389, %s28, 1
        %s1391 = smul.addr %s1390, 8
        %s1392 = scalar_lea.vmem %s6, %s1391
        // Predicated region
        $region57: #{tpu_custom_call.1} parent=39 // pred_check
          %p1393 = pneg %p161
        $region58: #{tpu_custom_call.1} parent=39 // pred_check_branch
          %1395 = sbr.rel (%p1393) target = $region60
        $region59: #{tpu_custom_call.1} parent=39 // pred_region
          %s1397 = ssub.s32 128, 128
          %1398 = vsyncadd %s1385, %s1397
          %s1399 = smul.addr %s28, 128
          %s1400 = scalar_lea.hbm %s5, %s1399
          %s1402 = sshll.u32 %s1388, 4
          %s1403 = int_to_ptr.vmem [resolvable:$true] %s1402
          %1405 = dma.vmem_to_hbm [thread:$0]  %s1403, 128, %s1400, %s1385
        $region60: #{tpu_custom_call.1} parent=39 // pred_fallthru
          _
        // Predicated region
        $region61: #{tpu_custom_call.1} parent=39 // pred_check
          %p1406 = pneg %p187
        $region62: #{tpu_custom_call.1} parent=39 // pred_check_branch
          %1408 = sbr.rel (%p1406) target = $region64
        $region63: #{tpu_custom_call.1} parent=39 // pred_region
          _
        $region64: #{tpu_custom_call.1} parent=39 // pred_fallthru
          _
      $region40: #{tpu_custom_call.1} parent=5 // pred_fallthru
        _
      %p1409 = scmp.le.s32.totalorder 2, %s23
      // Predicated region
      $region65: #{tpu_custom_call.1} parent=5 // pred_check
        %p1410 = pneg %p1409
      $region66: #{tpu_custom_call.1} parent=5 // pred_check_branch
        %1412 = sbr.rel (%p1410) target = $region68
      $region67: #{tpu_custom_call.1} parent=5 // pred_region
        %s1413 = ssub.s32 %s23, 2
        // Predicated region
        $region69: #{tpu_custom_call.1} parent=67 // pred_check
          %p1414 = pneg %p167
        $region70: #{tpu_custom_call.1} parent=67 // pred_check_branch
          %1416 = sbr.rel (%p1414) target = $region72
        $region71: #{tpu_custom_call.1} parent=67 // pred_region
          %s1417 = sand.u32 %s152, 1
          %s1418 = scalar_lea.sflag [#allocation4], %s1417
          %s1419 = sand.u32 %s152, 1
          %s1420 = smul.addr %s1419, 8
          %s1421 = scalar_lea.vmem [#allocation10], %s1420
          %1422 = dma.done %s1418, 128
        $region72: #{tpu_custom_call.1} parent=67 // pred_fallthru
          _
        // Predicated region
        $region73: #{tpu_custom_call.1} parent=67 // pred_check
          %p1423 = pneg %p193
        $region74: #{tpu_custom_call.1} parent=67 // pred_check_branch
          %1425 = sbr.rel (%p1423) target = $region76
        $region75: #{tpu_custom_call.1} parent=67 // pred_region
          %p1426 = scmp.lt.s32.totalorder %s29, 1
          %s1427 = scalar_select %p1426, %s29, 1
          %s1428 = smul.addr %s1427, 8
          %s1429 = scalar_lea.vmem %s6, %s1428
        $region76: #{tpu_custom_call.1} parent=67 // pred_fallthru
          _
      $region68: #{tpu_custom_call.1} parent=5 // pred_fallthru
        _
    $region6: #{tpu_custom_call.1} parent=1 // loop_footer
      %s27 = sadd.s32 1, %s23
    $region7: #{tpu_custom_call.1} parent=1 // loop_footer_branch
      %22 = sbr.rel target = $region3
    $region8: #{tpu_custom_call.1} parent=1 // loop_exit
      _
    %1430 = vsyncpa [#allocation3], 1
    %s1431 = scalar_lea.sflag [#allocation3], 1
    %1432 = vsyncpa %s1431, 1
    %1433 = vsyncpa [#allocation6], 1
    %s1434 = scalar_lea.sflag [#allocation6], 1
    %1435 = vsyncpa %s1434, 1
    %1436 = vsyncpa [#allocation9], 1
    %1437 = vsyncpa [#allocation4], 1
    %s1438 = scalar_lea.sflag [#allocation4], 1
    %1439 = vsyncpa %s1438, 1

</llo_original>
